<compile_context>
chip_gen: v6e
topology: v6e:2x2x1
jax: 0.10.0
libtpu: 0.0.40
codegen_flags: <defaults>
</compile_context>

<pallas_src>
import jax
import jax.numpy as jnp
from jax.experimental import pallas as pl
from jax.experimental.pallas import tpu as pltpu

IGNORE_INDEX = -100
_NEG_INF = -1e30  # finite "minus infinity": exp()==0 without inf-inf NaNs


def _round_up(x, m):
    return ((x + m - 1) // m) * m


# ----------------------------------------------------------------------------
# Fused kernel: classifier head (MXU) + masked cross-entropy on the same tile
# ----------------------------------------------------------------------------
def _fused_head_ce_kernel(h_ref, w_ref, b_ref, al_ref, emis_ref, sum_ref, cnt_ref):
    i = pl.program_id(0)

    # ---- classifier head: (TILE_N, H) @ (H, Cpad), bf16 in / f32 accumulate
    logits = jnp.dot(h_ref[...], w_ref[...], preferred_element_type=jnp.float32)
    logits = logits + b_ref[...]          # padded class columns carry _NEG_INF
    emis_ref[...] = logits.astype(emis_ref.dtype)   # lane-dense (TILE_N, Cpad) store

    # ---- masked cross entropy on the VMEM-resident tile (all f32 elementwise)
    al = al_ref[...]                      # (TILE_N, 1) int32, -100 == ignore
    valid = al != IGNORE_INDEX

    row_max = jnp.max(logits, axis=-1, keepdims=True)
    lse = row_max + jnp.log(
        jnp.sum(jnp.exp(logits - row_max), axis=-1, keepdims=True))

    # gather logit at the label index via one-hot iota compare
    col = jax.lax.broadcasted_iota(jnp.int32, logits.shape, 1)
    label_logit = jnp.sum(jnp.where(col == al, logits, 0.0), axis=-1, keepdims=True)

    per_tok = jnp.where(valid, lse - label_logit, 0.0)
    tile_sum = jnp.sum(per_tok)
    tile_cnt = jnp.sum(valid.astype(jnp.float32))

    # ---- accumulate scalars across the (sequential) token-tile grid in SMEM
    @pl.when(i == 0)
    def _init():
        sum_ref[0, 0] = jnp.float32(0.0)
        cnt_ref[0, 0] = jnp.float32(0.0)

    sum_ref[0, 0] += tile_sum
    cnt_ref[0, 0] += tile_cnt


def fused_classifier_and_loss(hidden, w, b, active_labels, *,
                              tile_n=256, compute_dtype=jnp.bfloat16):
    """Returns (emissions (N, C) f32, loss_sum scalar, active_count scalar)."""
    N, H = hidden.shape
    C = w.shape[1]

    c_pad = _round_up(max(C, 128), 128)          # lane-dense class axis
    tile_n = min(tile_n, _round_up(N, 8))        # don't over-pad tiny inputs
    n_pad = _round_up(N, tile_n)
    n_tiles = n_pad // tile_n

    # ---- pad operands (cheap XLA glue); padded rows are "ignored" tokens ----
    h_p = jnp.zeros((n_pad, H), compute_dtype).at[:N, :].set(hidden.astype(compute_dtype))
    w_p = jnp.zeros((H, c_pad), compute_dtype).at[:, :C].set(w.astype(compute_dtype))
    b_p = jnp.full((1, c_pad), _NEG_INF, jnp.float32).at[0, :C].set(b.astype(jnp.float32))
    al_p = jnp.full((n_pad, 1), IGNORE_INDEX, jnp.int32).at[:N, 0].set(
        active_labels.astype(jnp.int32))

    bytes_accessed = (h_p.size * h_p.dtype.itemsize
                      + w_p.size * w_p.dtype.itemsize
                      + b_p.size * 4 + al_p.size * 4
                      + n_pad * c_pad * 4 + 8)
    cost = pl.CostEstimate(
        flops=2 * n_pad * H * c_pad,
        transcendentals=n_pad * c_pad + n_pad,   # exp per logit + log per row
        bytes_accessed=int(bytes_accessed),
    )

    emis_pad, loss_sum, cnt = pl.pallas_call(
        _fused_head_ce_kernel,
        out_shape=(
            jax.ShapeDtypeStruct((n_pad, c_pad), jnp.float32),
            jax.ShapeDtypeStruct((1, 1), jnp.float32),
            jax.ShapeDtypeStruct((1, 1), jnp.float32),
        ),
        grid_spec=pltpu.PrefetchScalarGridSpec(
            num_scalar_prefetch=0,
            grid=(n_tiles,),
            in_specs=[
                pl.BlockSpec((tile_n, H), lambda i: (i, 0)),      # hidden tile
                pl.BlockSpec((H, c_pad), lambda i: (0, 0)),       # W (resident)
                pl.BlockSpec((1, c_pad), lambda i: (0, 0)),       # bias
                pl.BlockSpec((tile_n, 1), lambda i: (i, 0)),      # active labels
            ],
            out_specs=(
                pl.BlockSpec((tile_n, c_pad), lambda i: (i, 0)),  # emissions tile
                pl.BlockSpec(memory_space=pltpu.MemorySpace.SMEM),  # loss sum
                pl.BlockSpec(memory_space=pltpu.MemorySpace.SMEM),  # active count
            ),
        ),
        compiler_params=pltpu.CompilerParams(
            # token-tile axis carries the scalar-loss reduction -> sequential
            dimension_semantics=("arbitrary",),
        ),
        cost_estimate=cost,
    )(h_p, w_p, b_p, al_p)

    emissions = emis_pad[:N, :C]
    return emissions, loss_sum[0, 0], cnt[0, 0]


# ----------------------------------------------------------------------------
# Loss_Wrapper forward
# ----------------------------------------------------------------------------
@jax.jit
def loss_wrapper_forward(params, input_ids, attention_mask=None, labels=None):
    B, S = input_ids.shape
    emb, w_cls, b_cls = params["emb"], params["w_cls"], params["b_cls"]
    C = w_cls.shape[1]

    # synthetic "model": embedding lookup (glue) feeding the fused Pallas kernel
    hidden = jnp.take(emb, input_ids.reshape(-1), axis=0)        # (B*S, H)

    if labels is not None:
        lab = labels.reshape(-1)
        if attention_mask is not None:
            active_labels = jnp.where(attention_mask.reshape(-1) == 1,
                                      lab, IGNORE_INDEX)
        else:
            active_labels = lab
    else:
        # no labels -> every token ignored; loss is not returned anyway
        active_labels = jnp.full((B * S,), IGNORE_INDEX, dtype=jnp.int32)

    logits2d, loss_sum, cnt = fused_classifier_and_loss(
        hidden, w_cls, b_cls, active_labels)
    emissions = logits2d.reshape(B, S, C)

    # NOTE: if every token is ignored, loss = 0/0 = NaN, matching PyTorch's
    # CrossEntropyLoss behaviour with all targets == ignore_index.
    loss = (loss_sum / cnt) if labels is not None else None
    return loss, emissions


# ----------------------------------------------------------------------------
# Pure-JAX reference (same bf16 matmul casting) for a silent correctness check
# ----------------------------------------------------------------------------
def _ref_forward(params, input_ids, attention_mask, labels,
                 compute_dtype=jnp.bfloat16):
    emb, w_cls, b_cls = params["emb"], params["w_cls"], params["b_cls"]
    B, S = input_ids.shape
    hidden = jnp.take(emb, input_ids.reshape(-1), axis=0)
    logits = jnp.dot(hidden.astype(compute_dtype), w_cls.astype(compute_dtype),
                     preferred_element_type=jnp.float32) + b_cls.astype(jnp.float32)
    emissions = logits.reshape(B, S, -1)
    if labels is None:
        return None, emissions
    lab = labels.reshape(-1)
    if attention_mask is not None:
        active = jnp.where(attention_mask.reshape(-1) == 1, lab, IGNORE_INDEX)
    else:
        active = lab
    valid = active != IGNORE_INDEX
    lse = jax.nn.logsumexp(logits, axis=-1)
    safe = jnp.where(valid, active, 0)
    lab_logit = jnp.take_along_axis(logits, safe[:, None], axis=-1)[:, 0]
    per = jnp.where(valid, lse - lab_logit, 0.0)
    loss = per.sum() / valid.sum()
    return loss, emissions


if __name__ == "__main__":
    root = jax.random.PRNGKey(0)

    def make_case(key, B, S, V, H, C):
        k_emb, k_w, k_b, k_ids, k_lab, k_mask = jax.random.split(key, 6)
        params = {
            "emb": jax.random.normal(k_emb, (V, H), dtype=jnp.float32) * 0.1,
            "w_cls": jax.random.normal(k_w, (H, C), dtype=jnp.float32) * 0.1,
            "b_cls": jax.random.normal(k_b, (C,), dtype=jnp.float32) * 0.01,
        }
        input_ids = jax.random.randint(k_ids, (B, S), 0, V, dtype=jnp.int32)
        labels = jax.random.randint(k_lab, (B, S), 0, C, dtype=jnp.int32)
        labels = labels.at[0, 0].set(IGNORE_INDEX)      # explicit ignore label
        attention_mask = (jax.random.uniform(k_mask, (B, S)) > 0.25).astype(jnp.int32)
        return params, input_ids, attention_mask, labels

    k1, k2 = jax.random.split(root)

    # Case 1: module's small shapes (single token tile).
    params, ids, mask, labels = make_case(k1, B=2, S=8, V=32, H=32, C=8)
    loss, emis = loss_wrapper_forward(params, ids, mask, labels)
    jax.block_until_ready((loss, emis))
    ref_loss, ref_emis = _ref_forward(params, ids, mask, labels)
    assert jnp.allclose(emis, ref_emis, atol=1e-3, rtol=1e-3)
    assert jnp.allclose(loss, ref_loss, atol=1e-3, rtol=1e-3)

    # Case 2: multi-tile grid, non-multiple-of-128 class count, padded tail rows.
    params2, ids2, mask2, labels2 = make_case(k2, B=4, S=160, V=64, H=64, C=10)
    loss2, emis2 = loss_wrapper_forward(params2, ids2, mask2, labels2)
    jax.block_until_ready((loss2, emis2))
    ref_loss2, ref_emis2 = _ref_forward(params2, ids2, mask2, labels2)
    assert jnp.allclose(emis2, ref_emis2, atol=1e-3, rtol=1e-3)
    assert jnp.allclose(loss2, ref_loss2, atol=1e-3, rtol=1e-3)

    # labels=None path: loss is None, emissions still produced.
    loss3, emis3 = loss_wrapper_forward(params, ids, mask, None)
    jax.block_until_ready(emis3)
    assert loss3 is None
    assert jnp.allclose(emis3, ref_emis, atol=1e-3, rtol=1e-3)

    print("KERNEL_OK")
</pallas_src>

<mosaic_0001>
module attributes {stable_mosaic.version = 11 : i64} {
  func.func @_fused_head_ce_kernel(%arg0: i32, %arg1: memref<16x32xbf16, #tpu.memory_space<vmem>>, %arg2: memref<32x128xbf16, #tpu.memory_space<vmem>>, %arg3: memref<1x128xf32, #tpu.memory_space<vmem>>, %arg4: memref<16x1xi32, #tpu.memory_space<vmem>>, %arg5: memref<16x128xf32, #tpu.memory_space<vmem>>, %arg6: memref<1x1xf32, #tpu.memory_space<smem>>, %arg7: memref<1x1xf32, #tpu.memory_space<smem>>) attributes {dimension_semantics = [#tpu.dimension_semantics<arbitrary>], iteration_bounds = array<i64: 1>, scalar_prefetch = 0 : i64, scratch_operands = 0 : i64, tpu.core_type = #tpu.core_type<tc>, window_params = [{transform_indices = @transform_0, window_bounds = array<i64: 16, 32>}, {pipeline_mode = #tpu.pipeline_mode<synchronous>, transform_indices = @transform_1, window_bounds = array<i64: 32, 128>}, {pipeline_mode = #tpu.pipeline_mode<synchronous>, transform_indices = @transform_2, window_bounds = array<i64: 1, 128>}, {transform_indices = @transform_3, window_bounds = array<i64: 16, 1>}, {transform_indices = @transform_4, window_bounds = array<i64: 16, 128>}, {transform_indices = @transform_5, window_bounds = array<i64: 1, 1>}, {transform_indices = @transform_6, window_bounds = array<i64: 1, 1>}]} {
    %c0 = arith.constant 0 : index
    %c0_0 = arith.constant 0 : index
    %0 = vector.load %arg1[%c0, %c0_0] : memref<16x32xbf16, #tpu.memory_space<vmem>>, vector<16x32xbf16>
    %c0_1 = arith.constant 0 : index
    %c0_2 = arith.constant 0 : index
    %1 = vector.load %arg2[%c0_1, %c0_2] : memref<32x128xbf16, #tpu.memory_space<vmem>>, vector<32x128xbf16>
    %cst = arith.constant dense<0.000000e+00> : vector<16x128xf32>
    %2 = tpu.matmul %0, %1, %cst {dimension_numbers = #tpu.dot_dimension_numbers<[1], [0], [0], [1], [0, 0, 1, 1], [], []>} : vector<16x32xbf16>, vector<32x128xbf16>, vector<16x128xf32> -> vector<16x128xf32>
    %c0_3 = arith.constant 0 : index
    %c0_4 = arith.constant 0 : index
    %3 = vector.load %arg3[%c0_3, %c0_4] : memref<1x128xf32, #tpu.memory_space<vmem>>, vector<1x128xf32>
    %4 = vector.broadcast %3 : vector<1x128xf32> to vector<16x128xf32>
    %5 = arith.addf %2, %4 : vector<16x128xf32>
    %c0_5 = arith.constant 0 : index
    %c0_6 = arith.constant 0 : index
    %6 = vector.load %arg5[%c0_5, %c0_6] : memref<16x128xf32, #tpu.memory_space<vmem>>, vector<16x128xf32>
    tpu.vector_store %arg5[%c0_5, %c0_6], %5 {strides = array<i32>} : memref<16x128xf32, #tpu.memory_space<vmem>>, vector<16x128xf32>,
    %c0_7 = arith.constant 0 : index
    %c0_8 = arith.constant 0 : index
    %7 = vector.load %arg4[%c0_7, %c0_8] : memref<16x1xi32, #tpu.memory_space<vmem>>, vector<16x1xi32>
    %c-100_i32 = arith.constant -100 : i32
    %8 = vector.broadcast %c-100_i32 : i32 to vector<16x1xi32>
    %9 = arith.cmpi ne, %7, %8 : vector<16x1xi32>
    %cst_9 = arith.constant dense<0xFF800000> : vector<16xf32>
    %10 = vector.multi_reduction <maximumf>, %5, %cst_9 [1] : vector<16x128xf32> to vector<16xf32>
    %11 = vector.shape_cast %10 : vector<16xf32> to vector<16x1xf32>
    %12 = vector.broadcast %11 : vector<16x1xf32> to vector<16x128xf32>
    %13 = arith.subf %5, %12 : vector<16x128xf32>
    %14 = math.exp %13 : vector<16x128xf32>
    %cst_10 = arith.constant dense<0.000000e+00> : vector<16xf32>
    %15 = vector.multi_reduction <add>, %14, %cst_10 [1] : vector<16x128xf32> to vector<16xf32>
    %16 = vector.shape_cast %15 : vector<16xf32> to vector<16x1xf32>
    %17 = math.log %16 : vector<16x1xf32>
    %18 = arith.addf %11, %17 : vector<16x1xf32>
    %19 = tpu.iota {dimensions = array<i32: 1>} : vector<16x128xi32>
    %20 = vector.broadcast %7 : vector<16x1xi32> to vector<16x128xi32>
    %21 = arith.cmpi eq, %19, %20 : vector<16x128xi32>
    %cst_11 = arith.constant 0.000000e+00 : f32
    %22 = vector.broadcast %cst_11 : f32 to vector<16x128xf32>
    %23 = arith.select %21, %5, %22 : vector<16x128xi1>, vector<16x128xf32>
    %cst_12 = arith.constant dense<0.000000e+00> : vector<16xf32>
    %24 = vector.multi_reduction <add>, %23, %cst_12 [1] : vector<16x128xf32> to vector<16xf32>
    %25 = vector.shape_cast %24 : vector<16xf32> to vector<16x1xf32>
    %26 = arith.subf %18, %25 : vector<16x1xf32>
    %cst_13 = arith.constant 0.000000e+00 : f32
    %27 = vector.broadcast %cst_13 : f32 to vector<16x1xf32>
    %28 = arith.select %9, %26, %27 : vector<16x1xi1>, vector<16x1xf32>
    %29 = vector.shape_cast %28 : vector<16x1xf32> to vector<1x16x1xf32>
    %cst_14 = arith.constant dense<0.000000e+00> : vector<1xf32>
    %30 = vector.multi_reduction <add>, %29, %cst_14 [1, 2] : vector<1x16x1xf32> to vector<1xf32>
    %31 = vector.shape_cast %30 : vector<1xf32> to vector<1x1x1xf32>
    %32 = vector.extract %31[0, 0, 0] : f32 from vector<1x1x1xf32>
    %33 = arith.extui %9 : vector<16x1xi1> to vector<16x1xi32>
    %34 = arith.sitofp %33 : vector<16x1xi32> to vector<16x1xf32>
    %35 = vector.shape_cast %34 : vector<16x1xf32> to vector<1x16x1xf32>
    %cst_15 = arith.constant dense<0.000000e+00> : vector<1xf32>
    %36 = vector.multi_reduction <add>, %35, %cst_15 [1, 2] : vector<1x16x1xf32> to vector<1xf32>
    %37 = vector.shape_cast %36 : vector<1xf32> to vector<1x1x1xf32>
    %38 = vector.extract %37[0, 0, 0] : f32 from vector<1x1x1xf32>
    %c0_i32 = arith.constant 0 : i32
    %39 = arith.cmpi eq, %arg0, %c0_i32 : i32
    %40 = arith.extui %39 : i1 to i32
    %c0_i32_16 = arith.constant 0 : i32
    %41 = arith.cmpi ne, %40, %c0_i32_16 : i32
    scf.if %41 {
      %cst_25 = arith.constant 0.000000e+00 : f32
      %c0_26 = arith.constant 0 : index
      %c0_27 = arith.constant 0 : index
      %48 = memref.load %arg6[%c0_26, %c0_27] : memref<1x1xf32, #tpu.memory_space<smem>>
      memref.store %cst_25, %arg6[%c0_26, %c0_27] : memref<1x1xf32, #tpu.memory_space<smem>>
      %cst_28 = arith.constant 0.000000e+00 : f32
      %c0_29 = arith.constant 0 : index
      %c0_30 = arith.constant 0 : index
      %49 = memref.load %arg7[%c0_29, %c0_30] : memref<1x1xf32, #tpu.memory_space<smem>>
      memref.store %cst_28, %arg7[%c0_29, %c0_30] : memref<1x1xf32, #tpu.memory_space<smem>>
    } else {
    }
    %c0_17 = arith.constant 0 : index
    %c0_18 = arith.constant 0 : index
    %42 = memref.load %arg6[%c0_17, %c0_18] : memref<1x1xf32, #tpu.memory_space<smem>>
    %43 = arith.addf %42, %32 : f32
    %c0_19 = arith.constant 0 : index
    %c0_20 = arith.constant 0 : index
    %44 = memref.load %arg6[%c0_19, %c0_20] : memref<1x1xf32, #tpu.memory_space<smem>>
    memref.store %43, %arg6[%c0_19, %c0_20] : memref<1x1xf32, #tpu.memory_space<smem>>
    %c0_21 = arith.constant 0 : index
    %c0_22 = arith.constant 0 : index
    %45 = memref.load %arg7[%c0_21, %c0_22] : memref<1x1xf32, #tpu.memory_space<smem>>
    %46 = arith.addf %45, %38 : f32
    %c0_23 = arith.constant 0 : index
    %c0_24 = arith.constant 0 : index
    %47 = memref.load %arg7[%c0_23, %c0_24] : memref<1x1xf32, #tpu.memory_space<smem>>
    memref.store %46, %arg7[%c0_23, %c0_24] : memref<1x1xf32, #tpu.memory_space<smem>>
    return
  }
  func.func @transform_0(%arg0: i32) -> (i32, i32) {
    %c0_i32 = arith.constant 0 : i32
    %c0_i32_0 = arith.constant 0 : i32
    return %arg0, %c0_i32 : i32, i32
  }
  func.func @transform_1(%arg0: i32) -> (i32, i32) {
    %c0_i32 = arith.constant 0 : i32
    %c0_i32_0 = arith.constant 0 : i32
    %c0_i32_1 = arith.constant 0 : i32
    return %c0_i32, %c0_i32_0 : i32, i32
  }
  func.func @transform_2(%arg0: i32) -> (i32, i32) {
    %c0_i32 = arith.constant 0 : i32
    %c0_i32_0 = arith.constant 0 : i32
    %c0_i32_1 = arith.constant 0 : i32
    return %c0_i32, %c0_i32_0 : i32, i32
  }
  func.func @transform_3(%arg0: i32) -> (i32, i32) {
    %c0_i32 = arith.constant 0 : i32
    %c0_i32_0 = arith.constant 0 : i32
    return %arg0, %c0_i32 : i32, i32
  }
  func.func @transform_4(%arg0: i32) -> (i32, i32) {
    %c0_i32 = arith.constant 0 : i32
    %c0_i32_0 = arith.constant 0 : i32
    return %arg0, %c0_i32 : i32, i32
  }
  func.func @transform_5(%arg0: i32) -> (i32, i32) {
    %c0_i32 = arith.constant 0 : i32
    %c0_i32_0 = arith.constant 0 : i32
    %c0_i32_1 = arith.constant 0 : i32
    return %c0_i32, %c0_i32_0 : i32, i32
  }
  func.func @transform_6(%arg0: i32) -> (i32, i32) {
    %c0_i32 = arith.constant 0 : i32
    %c0_i32_0 = arith.constant 0 : i32
    %c0_i32_1 = arith.constant 0 : i32
    return %c0_i32, %c0_i32_0 : i32, i32
  }
}

</mosaic_0001>

<llo_original>
// kernel: loss_wrapper_forward.1
$region0: #{loss_wrapper_forward.1}
  #allocation0 [shape = 'u32[]', space=smem, size = 0x4, offset = 0x4, fixed_abs, tag = 'smem constant byte address 0x4 - core index']
  #allocation1 [shape = 'u32[144,128]{1,0:T(1,128)}', space=vmem, size = 0x12000, scoped, tag = 'internal scratch']
  %s0 = inlined_call_operand.vmem [shape: bf16[16,32], index: 0, kind: input, shape index: {}]
  %s1 = inlined_call_operand.vmem [shape: bf16[32,128], index: 1, kind: input, shape index: {}]
  %s2 = inlined_call_operand.vmem [shape: f32[1,128], index: 2, kind: input, shape index: {}]
  %s3 = inlined_call_operand.vmem [shape: s32[16,1], index: 3, kind: input, shape index: {}]
  %s4 = inlined_call_operand.vmem [shape: f32[16,128], index: 4, kind: output, shape index: {0}]
  %s5 = inlined_call_operand.hbm [shape: f32[1,1], index: 5, kind: output, shape index: {1}]
  %s6 = inlined_call_operand.hbm [shape: f32[1,1], index: 6, kind: output, shape index: {2}]
  %7 = xla_tuple %s4, %s5, %s6
  %s8 = sld [smem:[#allocation0]]
  $region46: #{loss_wrapper_forward.1} parent=0
    _
  %s10 = ssub.s32 1, %s8
  %s11 = scalar_select 0, %s10, %s8
  $region1: #{loss_wrapper_forward.1} parent=0
    #allocation2 [shape = 'u8[512]{0}', space=smem, size = 0x200, scoped, tag = 'output window, operand 1, single buffered']
    #allocation3 [shape = 's32[1]{0}', space=sflag, size = 0x4, scoped, tag = 'scoped memory for loss_wrapper_forward.1']
    #allocation4 [shape = 'u8[512]{0}', space=smem, size = 0x200, scoped, tag = 'output window, operand 2, single buffered']
    #allocation5 [shape = 's32[1]{0}', space=sflag, size = 0x4, scoped, tag = 'scoped memory for loss_wrapper_forward.1']
    %12 = vsyncpa [#allocation3], 0
    %13 = vsyncpa [#allocation5], 0
    // Predicated region
    $region2: #{loss_wrapper_forward.1} parent=1 // pred_check
      _
    $region3: #{loss_wrapper_forward.1} parent=1 // pred_check_branch
      %15 = sbr.rel (0) target = $region5
    $region4: #{loss_wrapper_forward.1} parent=1 // pred_region
      _
    $region5: #{loss_wrapper_forward.1} parent=1 // pred_fallthru
      _
    // Predicated region
    $region6: #{loss_wrapper_forward.1} parent=1 // pred_check
      _
    $region7: #{loss_wrapper_forward.1} parent=1 // pred_check_branch
      %17 = sbr.rel (0) target = $region9
    $region8: #{loss_wrapper_forward.1} parent=1 // pred_region
      _
    $region9: #{loss_wrapper_forward.1} parent=1 // pred_fallthru
      _
    // Predicated region
    $region10: #{loss_wrapper_forward.1} parent=1 // pred_check
      _
    $region11: #{loss_wrapper_forward.1} parent=1 // pred_check_branch
      %19 = sbr.rel (0) target = $region13
    $region12: #{loss_wrapper_forward.1} parent=1 // pred_region
      _
    $region13: #{loss_wrapper_forward.1} parent=1 // pred_fallthru
      _
    // Predicated region
    $region14: #{loss_wrapper_forward.1} parent=1 // pred_check
      _
    $region15: #{loss_wrapper_forward.1} parent=1 // pred_check_branch
      %21 = sbr.rel (0) target = $region17
    $region16: #{loss_wrapper_forward.1} parent=1 // pred_region
      _
    $region17: #{loss_wrapper_forward.1} parent=1 // pred_fallthru
      _
    %v23 = vld [vmem:[%s0] sm:$0xf]
    %v24 = vld [vmem:[%s0 + $0x4] sm:$0xf]
    %v25 = vld [vmem:[%s1] sm:$0xf]
    %v26 = vld [vmem:[%s1 + $0x4] sm:$0xf]
    %v27 = vld [vmem:[%s1 + $0x8] sm:$0xf]
    %v28 = vld [vmem:[%s1 + $0xc] sm:$0xf]
    %v29 = vld [vmem:[%s2] sm:$0x1]
    %v31 = vlaneseq
    %v32 = vshrl.u32 %v31, 7
    %v33 = vsub.s32 0, %v32
    %v34 = vrot.slane %v29, %v33
    %v38 = vunpack.c.l.b16 %v23
    %v39 = vunpack.c.l.b16 %v24
    %v40 = vpack.c.b16 %v39, %v38
    %v45 = vunpack.c.l.b16 %v25
    %v46 = vunpack.c.l.b16 %v26
    %v47 = vunpack.c.l.b16 %v27
    %v48 = vunpack.c.l.b16 %v28
    %v49 = vpack.c.b16 %v46, %v45
    %v50 = vpack.c.b16 %v48, %v47
    %vm53 = vcmask 261120
    %v55 = vsel %vm53, %v40, 0
    %57 = vmatprep.subr.bf16.mxu0 0
    %58 = vmatpush1.bf16.msra.mxu0 0
    %59 = vmatprep.subr.bf16.mxu0 0
    %60 = vmatpush1.bf16.msra.mxu0 0
    %61 = vmatprep.subr.bf16.mxu0 0
    %62 = vmatpush1.bf16.msra.mxu0 0
    %63 = vmatprep.subr.bf16.mxu0 0
    %64 = vmatpush1.bf16.msra.mxu0 0
    %65 = vmatprep.subr.bf16.mxu0 0
    %66 = vmatpush1.bf16.msra.mxu0 0
    %67 = vmatprep.subr.bf16.mxu0 0
    %68 = vmatpush1.bf16.msra.mxu0 0
    %69 = vmatprep.subr.bf16.mxu0 0
    %70 = vmatpush1.bf16.msra.mxu0 %v50
    %71 = vmatprep.subr.bf16.mxu0 0
    %72 = vmatpush1.bf16.msra.mxu0 %v49
    %73 = vmatprep.subr.bf16.mxu0 0
    %74 = vmatpush2.bf16.msra.mxu0 0
    %75 = vmatprep.subr.bf16.mxu0 0
    %76 = vmatpush2.bf16.msra.mxu0 0
    %77 = vmatprep.subr.bf16.mxu0 0
    %78 = vmatpush2.bf16.msra.mxu0 0
    %79 = vmatprep.subr.bf16.mxu0 0
    %80 = vmatpush2.bf16.msra.mxu0 0
    %81 = vmatprep.subr.bf16.mxu0 0
    %82 = vmatpush2.bf16.msra.mxu0 0
    %83 = vmatprep.subr.bf16.mxu0 0
    %84 = vmatpush2.bf16.msra.mxu0 0
    %85 = vmatprep.subr.bf16.mxu0 0
    %86 = vmatpush2.bf16.msra.mxu0 0
    %87 = vmatprep.subr.bf16.mxu0 0
    %88 = vmatpush2.bf16.msra.mxu0 0
    %89 = vmatprep.mubr.bf16.mxu0 0
    %90 = vmatmul.mubr.bf16.gmra.mxu0 %v55
    %v91 = vpop.f32.mrf.mxu0
    %v92 = vadd.f32 %v34, %v91
    %v93 = vpop.f32.mrf.mxu0
    %v94 = vpop.f32.mrf.mxu0
    %v95 = vadd.f32 %v34, %v94
    %v96 = vpop.f32.mrf.mxu0
    %97 = vdwg.mxu0
    %98 = vst [vmem:[%s4] sm:$0xff] %v92
    %99 = vst [vmem:[%s4 + $0x8] sm:$0xff] %v95
    %v100 = vld [vmem:[%s3] sm:$0xff]
    %v101 = vld [vmem:[%s3 + $0x8] sm:$0xff]
    %vm102 = vcmp.ne.s32.totalorder %v100, 4294967196
    %vm103 = vcmp.ne.s32.totalorder %v101, 4294967196
    %104 = vmax.xlane.f32.xlu0 %v92
    %v105 = vpop.xlane.xlu0 %104
    %106 = vmax.xlane.f32.xlu0 %v95
    %v107 = vpop.xlane.xlu0 %106
    %v108 = vsub.f32 %v92, %v105
    %v109 = vsub.f32 %v95, %v107
    %v110 = vmul.f32 %v108, 1.442695
    %v111 = vpow.pop %v110
    %v112 = vmul.f32 %v109, 1.442695
    %v113 = vpow.pop %v112
    %114 = vadd.xlane.f32.xlu0 %v111
    %v115 = vpop.xlane.xlu0 %114
    %116 = vadd.xlane.f32.xlu0 %v113
    %v117 = vpop.xlane.xlu0 %116
    %v118 = vlog2.pop %v115
    %v119 = vmul.f32 %v118, 0.6931472
    %v120 = vlog2.pop %v117
    %v121 = vmul.f32 %v120, 0.6931472
    %v122 = vadd.f32 %v105, %v119
    %v123 = vadd.f32 %v107, %v121
    %v124 = vlaneseq
    %v125 = vand.u32 %v124, 127
    %126 = vset.pattern.permute.xlu0 0
    %127 = vperm.xlu0 %126, %v100
    %v128 = vpop.permute.xlu0 %127
    %129 = vset.pattern.permute.xlu0 0
    %130 = vperm.xlu0 %129, %v101
    %v131 = vpop.permute.xlu0 %130
    %vm132 = vcmp.eq.s32.totalorder %v125, %v128
    %vm133 = vcmp.eq.s32.totalorder %v125, %v131
    %v134 = vsel %vm132, %v92, 0.0
    %v135 = vsel %vm133, %v95, 0.0
    %136 = vadd.xlane.f32.xlu0 %v134
    %v137 = vpop.xlane.xlu0 %136
    %138 = vadd.xlane.f32.xlu0 %v135
    %v139 = vpop.xlane.xlu0 %138
    %v140 = vsub.f32 %v122, %v137
    %v141 = vsub.f32 %v123, %v139
    %v142 = vsel %vm102, %v140, 0.0
    %v143 = vsel %vm103, %v141, 0.0
    %vm144 = vcmask 7168
    %v145 = vsel %vm144, %v142, 0.0
    %v146 = vsel %vm144, %v143, 0.0
    %v147 = vadd.f32 %v145, %v146
    %148 = vadd.xlane.f32.xlu0 %v147
    %v149 = vpop.xlane.xlu0 %148
    %v150 = vrot.slane %v149, 4
    %v151 = vadd.f32 %v149, %v150
    %v152 = vrot.slane %v151, 2
    %v153 = vadd.f32 %v151, %v152
    %v154 = vrot.slane %v153, 1
    %v155 = vadd.f32 %v153, %v154
    %s156 = vtos %v155
    %v157 = vsel %vm102, 1, 0
    %v158 = vsel %vm103, 1, 0
    %v159 = vcvt.s32.f32 %v157
    %v160 = vcvt.s32.f32 %v158
    %v161 = vsel %vm144, %v159, 0.0
    %v162 = vsel %vm144, %v160, 0.0
    %v163 = vadd.f32 %v161, %v162
    %164 = vadd.xlane.f32.xlu0 %v163
    %v165 = vpop.xlane.xlu0 %164
    %v166 = vrot.slane %v165, 4
    %v167 = vadd.f32 %v165, %v166
    %v168 = vrot.slane %v167, 2
    %v169 = vadd.f32 %v167, %v168
    %v170 = vrot.slane %v169, 1
    %v171 = vadd.f32 %v169, %v170
    %s172 = vtos %v171
    %p173 = scmp.eq.s32.totalorder 0, 0
    // Predicated region
    $region18: #{loss_wrapper_forward.1} parent=1 // pred_check
      %p174 = pneg %p173
    $region19: #{loss_wrapper_forward.1} parent=1 // pred_check_branch
      %176 = sbr.rel (%p174) target = $region21
    $region20: #{loss_wrapper_forward.1} parent=1 // pred_region
      %s177 = scalar_lea.smem [#allocation2], 0
      %178 = sst [smem:[%s177]] 0.0
      %s179 = scalar_lea.smem [#allocation4], 0
      %180 = sst [smem:[%s179]] 0.0
    $region21: #{loss_wrapper_forward.1} parent=1 // pred_fallthru
      _
    %s181 = sld [smem:[#allocation2]]
    %s182 = sadd.f32 %s181, %s156
    %s183 = scalar_lea.smem [#allocation2], 0
    %184 = sst [smem:[%s183]] %s182
    %s185 = sld [smem:[#allocation4]]
    %s186 = sadd.f32 %s185, %s172
    %s187 = scalar_lea.smem [#allocation4], 0
    %188 = sst [smem:[%s187]] %s186
    // Predicated region
    $region22: #{loss_wrapper_forward.1} parent=1 // pred_check
      _
    $region23: #{loss_wrapper_forward.1} parent=1 // pred_check_branch
      %190 = sbr.rel (0) target = $region25
    $region24: #{loss_wrapper_forward.1} parent=1 // pred_region
      _
    $region25: #{loss_wrapper_forward.1} parent=1 // pred_fallthru
      _
    // Predicated region
    $region26: #{loss_wrapper_forward.1} parent=1 // pred_check
      _
    $region27: #{loss_wrapper_forward.1} parent=1 // pred_check_branch
      %192 = sbr.rel (0) target = $region29
    $region28: #{loss_wrapper_forward.1} parent=1 // pred_region
      %s194 = ssub.s32 16, 16
      %195 = vsyncadd [#allocation3], %s194
      %198 = dma.smem_to_hbm [#allocation2], 16, %s5, [#allocation3]
    $region29: #{loss_wrapper_forward.1} parent=1 // pred_fallthru
      _
    // Predicated region
    $region30: #{loss_wrapper_forward.1} parent=1 // pred_check
      _
    $region31: #{loss_wrapper_forward.1} parent=1 // pred_check_branch
      %200 = sbr.rel (0) target = $region33
    $region32: #{loss_wrapper_forward.1} parent=1 // pred_region
      %s202 = ssub.s32 16, 16
      %203 = vsyncadd [#allocation5], %s202
      %206 = dma.smem_to_hbm [#allocation4], 16, %s6, [#allocation5]
    $region33: #{loss_wrapper_forward.1} parent=1 // pred_fallthru
      _
    // Predicated region
    $region34: #{loss_wrapper_forward.1} parent=1 // pred_check
      _
    $region35: #{loss_wrapper_forward.1} parent=1 // pred_check_branch
      %208 = sbr.rel (0) target = $region37
    $region36: #{loss_wrapper_forward.1} parent=1 // pred_region
      _
    $region37: #{loss_wrapper_forward.1} parent=1 // pred_fallthru
      _
    // Predicated region
    $region38: #{loss_wrapper_forward.1} parent=1 // pred_check
      _
    $region39: #{loss_wrapper_forward.1} parent=1 // pred_check_branch
      %210 = sbr.rel (0) target = $region41
    $region40: #{loss_wrapper_forward.1} parent=1 // pred_region
      %211 = dma.done [#allocation3], 16
    $region41: #{loss_wrapper_forward.1} parent=1 // pred_fallthru
      _
    // Predicated region
    $region42: #{loss_wrapper_forward.1} parent=1 // pred_check
      _
    $region43: #{loss_wrapper_forward.1} parent=1 // pred_check_branch
      %213 = sbr.rel (0) target = $region45
    $region44: #{loss_wrapper_forward.1} parent=1 // pred_region
      %214 = dma.done [#allocation5], 16
    $region45: #{loss_wrapper_forward.1} parent=1 // pred_fallthru
      _
    %215 = sfence
    %216 = vsyncpa [#allocation3], 1
    %217 = vsyncpa [#allocation5], 1

</llo_original>
